<compile_context>
chip_gen: v5e
topology: v5e:2x2
jax: 0.10.0
libtpu: 0.0.40
codegen_flags: <defaults>
</compile_context>

<pallas_src>
import numpy as np
import jax
import jax.numpy as jnp
from jax.experimental import pallas as pl
from jax.experimental.pallas import tpu as pltpu


_VMEM_LIMIT_BYTES = 32 * 1024 * 1024   # <= scoped/physical VMEM on v5e / v6e / v7x
_F16_MAX = 65504.0                     # PyTorch module clamps intersection extents to f16 max


def _round_up(n, m):
    return ((n + m - 1) // m) * m


# ---------------------------------------------------------------------------
# BBoxCornerToCenter
# ---------------------------------------------------------------------------
def _corner_to_center_kernel(x_ref, o_ref):
    # x_ref: (4, T) rows [xmin, ymin, xmax, ymax]   (flattened boxes on the lane axis)
    # o_ref: (4, T) rows [xc,   yc,   w,    h   ]
    x = x_ref[...]
    mins = x[0:2, :]                          # (2, T)  [xmin ; ymin]
    maxs = x[2:4, :]                          # (2, T)  [xmax ; ymax]
    wh = maxs - mins                          # (2, T)  [w ; h]
    half = jnp.asarray(0.5, dtype=wh.dtype)   # dtype-matched: no silent f32 upcast for bf16
    center = (mins + wh) * half               # keep (min + wh)/2 form (PyTorch bit-parity)
    # Single fused (4, T) store (v5e has only one vector-store slot per bundle).
    o_ref[...] = jnp.concatenate([center, wh], axis=0).astype(o_ref.dtype)


def bbox_corner_to_center(x, *, tile_lanes=65536, allow_input_fusion=True):
    """x: (..., 4) corner boxes [xmin, ymin, xmax, ymax].

    Returns (x_center, y_center, width, height), each shaped (..., 1), dtype of x.
    """
    assert x.shape[-1] == 4, "last axis must hold [xmin, ymin, xmax, ymax]"
    lead = x.shape[:-1]
    M = int(np.prod(lead)) if lead else 1
    dtype = x.dtype

    # Coordinate-major layout: coords on sublanes, flattened boxes on the fast lane axis.
    # Under jit, allow_input_fusion lets XLA try to fuse this relayout into the
    # pallas_call operand instead of a separate HBM read+write pass.
    x2d = jnp.transpose(x.reshape(M, 4))      # (4, M)

    # Lane tile: multiple of 128, capped at tile_lanes, and sized so the 1-D grid has
    # >=2 steps whenever M is big enough (v7x megacore sharding).
    tile_lanes = _round_up(max(int(tile_lanes), 128), 128)
    T = min(tile_lanes, max(128, _round_up(pl.cdiv(M, 2), 128)))
    grid = (pl.cdiv(M, T),)                   # ragged last block handled by Pallas

    out = pl.pallas_call(
        _corner_to_center_kernel,
        out_shape=jax.ShapeDtypeStruct((4, M), dtype),
        grid=grid,
        in_specs=[pl.BlockSpec((4, T), lambda i: (0, i))],
        out_specs=pl.BlockSpec((4, T), lambda i: (0, i)),
        compiler_params=pltpu.CompilerParams(
            dimension_semantics=("parallel",),
            vmem_limit_bytes=_VMEM_LIMIT_BYTES,
            allow_input_fusion=[True] if allow_input_fusion else None,
        ),
    )(x2d)

    out_shape = lead + (1,)
    return tuple(out[r].reshape(out_shape) for r in range(4))  # xc, yc, w, h


# ---------------------------------------------------------------------------
# BBoxBatchIOU
# ---------------------------------------------------------------------------
def _batch_iou_kernel(aT_ref, b_ref, o_ref):
    # aT_ref: (4, TN) coordinate-major prediction boxes [l; t; r; b] (lane-dense)
    # b_ref : (M, 4)  GT corner boxes (tiny, resident)
    # o_ref : (M, TN) IOU tile: GT boxes on sublanes, predictions on lanes
    aT = aT_ref[...]
    b = b_ref[...]
    al, at_, ar, ab_ = aT[0:1, :], aT[1:2, :], aT[2:3, :], aT[3:4, :]   # (1, TN)
    bl, bt, br, bb = b[:, 0:1], b[:, 1:2], b[:, 2:3], b[:, 3:4]         # (M, 1)

    left = jnp.maximum(al, bl)                # (M, TN)
    right = jnp.minimum(ar, br)
    top = jnp.maximum(at_, bt)
    bot = jnp.minimum(ab_, bb)

    zero = jnp.asarray(0.0, dtype=aT.dtype)
    fmax = jnp.asarray(_F16_MAX, dtype=aT.dtype)
    iw = jnp.clip(right - left, zero, fmax)
    ih = jnp.clip(bot - top, zero, fmax)
    inter = iw * ih                           # (M, TN)

    area_a = (ar - al) * (ab_ - at_)          # (1, TN)
    area_b = (br - bl) * (bb - bt)            # (M, 1)
    union = (area_a + area_b) - inter         # (M, TN)
    # union == 0 (two degenerate boxes) -> NaN, same as the PyTorch module.
    # EUP reciprocal + VPU multiply instead of a divide.
    o_ref[...] = (inter * pl.reciprocal(union, approx=False)).astype(o_ref.dtype)


def bbox_batch_iou(a, b, *, tile_n=8192, out_layout="BNM", allow_input_fusion=True,
                   vmem_budget_bytes=12 * 1024 * 1024):
    """a: (B, N, 4) boxes, b: (B, M, 4) boxes (corner format).

    out_layout="BNM" (default) returns (B, N, M) exactly like the PyTorch module.
    out_layout="BMN" returns the kernel-native (B, M, N) and skips the final XLA
    transpose -- preferred when the consumer reduces over the GT axis, e.g.
    Encoderdynamic's `batch_ious.max(dim=-1)` for objectness_dynamic.
    """
    assert out_layout in ("BNM", "BMN")
    B, N, ca = a.shape
    Bb, M, cb = b.shape
    assert ca == 4 and cb == 4 and B == Bb
    dtype = a.dtype
    itemsize = jnp.dtype(dtype).itemsize

    # Coordinate-major predictions: coords on sublanes, the large N axis on lanes.
    aT = jnp.transpose(a, (0, 2, 1))          # (B, 4, N)

    # Lane tile over N: multiple of 128, at least 2 steps when N is big enough,
    # clamped so the double-buffered a-block + out-block stay under vmem_budget_bytes.
    tile_n = _round_up(max(int(tile_n), 128), 128)
    TN = min(tile_n, max(128, _round_up(pl.cdiv(N, 2), 128)))
    per_lane = (8 + _round_up(M, 8)) * itemsize * 2        # a-block + out-block, x2 buffers
    max_tn = max(128, (int(vmem_budget_bytes) // per_lane) // 128 * 128)
    TN = min(TN, max_tn)
    grid = (B, pl.cdiv(N, TN))                # ragged last N-block handled by Pallas

    out = pl.pallas_call(
        _batch_iou_kernel,
        out_shape=jax.ShapeDtypeStruct((B, M, N), dtype),
        grid=grid,
        in_specs=[
            pl.BlockSpec((None, 4, TN), lambda bi, ni: (bi, 0, ni)),   # predictions
            pl.BlockSpec((None, M, 4), lambda bi, ni: (bi, 0, 0)),     # GT boxes (resident)
        ],
        out_specs=pl.BlockSpec((None, M, TN), lambda bi, ni: (bi, 0, ni)),
        compiler_params=pltpu.CompilerParams(
            dimension_semantics=("parallel", "parallel"),
            vmem_limit_bytes=_VMEM_LIMIT_BYTES,
            allow_input_fusion=[True, False] if allow_input_fusion else None,
        ),
    )(aT, b)

    if out_layout == "BMN":
        return out                            # (B, M, N) kernel-native layout
    return jnp.transpose(out, (0, 2, 1))      # (B, N, M) module-faithful layout


# ---------------------------------------------------------------------------
# Pure-JAX references (mirror the PyTorch modules)
# ---------------------------------------------------------------------------
def _corner_to_center_reference(x):
    xmin, ymin, xmax, ymax = jnp.split(x, 4, axis=-1)
    width = xmax - xmin
    height = ymax - ymin
    x_center = (xmin + width) / 2.0
    y_center = (ymin + height) / 2.0
    return x_center, y_center, width, height


def _batch_iou_reference(a, b):
    al, at, ar, ab = (a[..., i] for i in range(4))
    bl, bt, br, bb = (b[..., i] for i in range(4))
    left = jnp.maximum(al[..., :, None], bl[..., None, :])
    right = jnp.minimum(ar[..., :, None], br[..., None, :])
    top = jnp.maximum(at[..., :, None], bt[..., None, :])
    bot = jnp.minimum(ab[..., :, None], bb[..., None, :])
    iw = jnp.clip(right - left, 0.0, _F16_MAX)
    ih = jnp.clip(bot - top, 0.0, _F16_MAX)
    inter = iw * ih
    area_a = ((ar - al) * (ab - at))[..., :, None]
    area_b = ((br - bl) * (bb - bt))[..., None, :]
    union = area_a + area_b - inter
    return inter / union


if __name__ == "__main__":
    key = jax.random.PRNGKey(0)
    B, N_GT, N_PRED = 2, 8, 300       # N_PRED deliberately not a multiple of 128 (ragged block)
    k1, k2, k3, k4 = jax.random.split(key, 4)

    def make_boxes(kmin, ksize, n):
        mins = jax.random.uniform(kmin, (B, n, 2), dtype=jnp.float32, minval=0.0, maxval=200.0)
        sizes = jax.random.uniform(ksize, (B, n, 2), dtype=jnp.float32, minval=1.0, maxval=100.0)
        return jnp.concatenate([mins, mins + sizes], axis=-1)   # (B, n, 4) corner boxes

    gt_boxes = make_boxes(k1, k2, N_GT)       # (2, 8, 4)
    box_preds = make_boxes(k3, k4, N_PRED)    # (2, 300, 4)

    # --- BBoxCornerToCenter (f32, tiny input: single partial lane block) ---
    outs = jax.block_until_ready(bbox_corner_to_center(gt_boxes))
    refs = _corner_to_center_reference(gt_boxes)
    for got, ref in zip(outs, refs):
        assert got.shape == ref.shape, (got.shape, ref.shape)
        assert got.dtype == ref.dtype, (got.dtype, ref.dtype)
        np.testing.assert_allclose(np.asarray(got), np.asarray(ref), rtol=1e-6, atol=1e-6)

    # --- BBoxCornerToCenter (f32, multi-step grid + ragged last block) ---
    outs_big = jax.block_until_ready(bbox_corner_to_center(box_preds, tile_lanes=256))
    refs_big = _corner_to_center_reference(box_preds)
    for got, ref in zip(outs_big, refs_big):
        assert got.shape == ref.shape, (got.shape, ref.shape)
        np.testing.assert_allclose(np.asarray(got), np.asarray(ref), rtol=1e-6, atol=1e-6)

    # --- BBoxCornerToCenter (bf16: dtype-matched constant, no silent f32 upcast) ---
    gt_bf16 = gt_boxes.astype(jnp.bfloat16)
    outs_bf16 = jax.block_until_ready(bbox_corner_to_center(gt_bf16))
    refs_bf16 = _corner_to_center_reference(gt_bf16)
    for got, ref in zip(outs_bf16, refs_bf16):
        assert got.dtype == jnp.bfloat16, got.dtype
        np.testing.assert_allclose(
            np.asarray(got.astype(jnp.float32)),
            np.asarray(ref.astype(jnp.float32)),
            rtol=2e-2, atol=2e-2,
        )

    # --- BBoxBatchIOU (box_preds vs gt_boxes, as used for objectness_dynamic) ---
    ious = jax.block_until_ready(bbox_batch_iou(box_preds, gt_boxes))
    ious_ref = _batch_iou_reference(box_preds, gt_boxes)
    assert ious.shape == (B, N_PRED, N_GT), ious.shape
    np.testing.assert_allclose(np.asarray(ious), np.asarray(ious_ref), rtol=1e-4, atol=1e-6)

    # --- BBoxBatchIOU kernel-native (B, M, N) layout (skips the final transpose) ---
    ious_bmn = jax.block_until_ready(bbox_batch_iou(box_preds, gt_boxes, out_layout="BMN"))
    assert ious_bmn.shape == (B, N_GT, N_PRED), ious_bmn.shape
    np.testing.assert_allclose(
        np.asarray(ious_bmn),
        np.asarray(jnp.transpose(ious_ref, (0, 2, 1))),
        rtol=1e-4, atol=1e-6,
    )

    print("KERNEL_OK")
</pallas_src>

<mosaic_0001>
module attributes {stable_mosaic.version = 11 : i64} {
  func.func @_corner_to_center_kernel(%arg0: i32, %arg1: memref<4x128xf32, #tpu.memory_space<vmem>>, %arg2: memref<4x128xf32, #tpu.memory_space<vmem>>) attributes {dimension_semantics = [#tpu.dimension_semantics<parallel>], iteration_bounds = array<i64: 1>, scalar_prefetch = 0 : i64, scratch_operands = 0 : i64, tpu.core_type = #tpu.core_type<tc>, window_params = [{transform_indices = @transform_0, window_bounds = array<i64: 4, 128>}, {transform_indices = @transform_1, window_bounds = array<i64: 4, 128>}]} {
    %c0 = arith.constant 0 : index
    %c0_0 = arith.constant 0 : index
    %0 = vector.load %arg1[%c0, %c0_0] : memref<4x128xf32, #tpu.memory_space<vmem>>, vector<4x128xf32>
    %1 = vector.extract_strided_slice %0 {offsets = [0, 0], sizes = [2, 128], strides = [1, 1]} : vector<4x128xf32> to vector<2x128xf32>
    %2 = vector.extract_strided_slice %0 {offsets = [2, 0], sizes = [2, 128], strides = [1, 1]} : vector<4x128xf32> to vector<2x128xf32>
    %3 = arith.subf %2, %1 : vector<2x128xf32>
    %4 = arith.addf %1, %3 : vector<2x128xf32>
    %cst = arith.constant 5.000000e-01 : f32
    %5 = vector.broadcast %cst : f32 to vector<2x128xf32>
    %6 = arith.mulf %4, %5 : vector<2x128xf32>
    %7 = tpu.concatenate %6, %3 in 0 : vector<2x128xf32>, vector<2x128xf32> -> vector<4x128xf32>
    %c0_1 = arith.constant 0 : index
    %c0_2 = arith.constant 0 : index
    %8 = vector.load %arg2[%c0_1, %c0_2] : memref<4x128xf32, #tpu.memory_space<vmem>>, vector<4x128xf32>
    tpu.vector_store %arg2[%c0_1, %c0_2], %7 {strides = array<i32>} : memref<4x128xf32, #tpu.memory_space<vmem>>, vector<4x128xf32>,
    return
  }
  func.func @transform_0(%arg0: i32) -> (i32, i32) {
    %c0_i32 = arith.constant 0 : i32
    %c0_i32_0 = arith.constant 0 : i32
    return %c0_i32, %arg0 : i32, i32
  }
  func.func @transform_1(%arg0: i32) -> (i32, i32) {
    %c0_i32 = arith.constant 0 : i32
    %c0_i32_0 = arith.constant 0 : i32
    return %c0_i32, %arg0 : i32, i32
  }
}

</mosaic_0001>

<llo_original>
// kernel: tpu_custom_call.1
$region0: #{tpu_custom_call.1}
  #allocation0 [shape = 'u32[]', space=smem, size = 0x4, offset = 0x4, fixed_abs, tag = 'smem constant byte address 0x4 - core index']
  #allocation1 [shape = 'u32[72,128]{1,0:T(1,128)}', space=vmem, size = 0x9000, scoped, tag = 'internal scratch']
  %s0 = inlined_call_operand.hbm [shape: f32[4,16], index: 0, kind: input, shape index: {}]
  %s1 = inlined_call_operand.hbm [shape: f32[4,16], index: 1, kind: output, shape index: {}]
  %s2 = sld [smem:[#allocation0]]
  $region18: #{tpu_custom_call.1} parent=0
    _
  %s4 = ssub.s32 1, %s2
  %s5 = scalar_select 0, %s4, %s2
  $region1: #{tpu_custom_call.1} parent=0
    #allocation2 [shape = 'u8[2048]{0}', space=vmem, size = 0x800, scoped, tag = 'input window, operand 0, single buffered']
    #allocation3 [shape = 's32[1]{0}', space=sflag, size = 0x4, scoped, tag = 'scoped memory for tpu_custom_call.1']
    #allocation4 [shape = 's32[1]{0}', space=sflag, size = 0x4, scoped, tag = 'scoped memory for tpu_custom_call.1']
    #allocation5 [shape = 'u8[2048]{0}', space=vmem, size = 0x800, scoped, tag = 'output window, operand 0, single buffered']
    %6 = vsyncpa [#allocation3], 0
    %7 = vsyncpa [#allocation4], 0
    // Predicated region
    $region2: #{tpu_custom_call.1} parent=1 // pred_check
      _
    $region3: #{tpu_custom_call.1} parent=1 // pred_check_branch
      %9 = sbr.rel (0) target = $region5
    $region4: #{tpu_custom_call.1} parent=1 // pred_region
      %11 = vsyncadd [#allocation3], 0
      %s13 = sshll.u32 %s0, 4
      %s14 = int_to_ptr.hbm [resolvable:$true] %s13
      %s15 = sshll.u32 [#allocation2], 4
      %s16 = int_to_ptr.vmem [resolvable:$true] %s15
      %18 = dma.hbm_to_vmem [thread:$0]  %s14, 64, %s16, [#allocation3]
    $region5: #{tpu_custom_call.1} parent=1 // pred_fallthru
      _
    // Predicated region
    $region6: #{tpu_custom_call.1} parent=1 // pred_check
      _
    $region7: #{tpu_custom_call.1} parent=1 // pred_check_branch
      %20 = sbr.rel (0) target = $region9
    $region8: #{tpu_custom_call.1} parent=1 // pred_region
      %22 = dma.done [#allocation3], 64
    $region9: #{tpu_custom_call.1} parent=1 // pred_fallthru
      _
    %v23 = vld [vmem:[#allocation2] sm:$0xf]
    %v25 = vrot.slane %v23, 6
    %v27 = vsub.f32 %v23, %v25
    %v29 = vrot.slane %v27, 2
    %v31 = vadd.f32 %v23, %v29
    %v32 = vmul.f32 %v31, 0.5
    %vm33 = vcmask 1041408
    %v34 = vsel %vm33, %v32, %v27
    %35 = vst [vmem:[#allocation5] sm:$0xf] %v34
    // Predicated region
    $region10: #{tpu_custom_call.1} parent=1 // pred_check
      _
    $region11: #{tpu_custom_call.1} parent=1 // pred_check_branch
      %37 = sbr.rel (0) target = $region13
    $region12: #{tpu_custom_call.1} parent=1 // pred_region
      %39 = vsyncadd [#allocation4], 0
      %s41 = sshll.u32 [#allocation5], 4
      %s42 = int_to_ptr.vmem [resolvable:$true] %s41
      %s43 = sshll.u32 %s1, 4
      %s44 = int_to_ptr.hbm [resolvable:$true] %s43
      %46 = dma.vmem_to_hbm [thread:$0]  %s42, 64, %s44, [#allocation4]
    $region13: #{tpu_custom_call.1} parent=1 // pred_fallthru
      _
    // Predicated region
    $region14: #{tpu_custom_call.1} parent=1 // pred_check
      _
    $region15: #{tpu_custom_call.1} parent=1 // pred_check_branch
      %48 = sbr.rel (0) target = $region17
    $region16: #{tpu_custom_call.1} parent=1 // pred_region
      %50 = dma.done [#allocation4], 64
    $region17: #{tpu_custom_call.1} parent=1 // pred_fallthru
      _
    %51 = vsyncpa [#allocation3], 1
    %52 = vsyncpa [#allocation4], 1

</llo_original>
